<compile_context>
chip_gen: v6e
topology: v6e:2x2x1
jax: 0.10.0
libtpu: 0.0.40
codegen_flags: <defaults>
</compile_context>

<pallas_src>
import functools
import math

import jax
import jax.numpy as jnp
from jax.experimental import pallas as pl
from jax.experimental.pallas import tpu as pltpu

NUM_EMB_ROWS = 6      # vocabulary size of each embedding table
NUM_FEATS = 3         # number of bond features / embedding tables
LANES = 128           # TPU vreg lane width


def _round_up(x, m):
    return ((x + m - 1) // m) * m


def _bond_encoder_kernel(idx_ref, sel_ref, tgt_ref, table_ref, out_ref):
    """One grid step.

    idx_ref   : int32 [TR, NCOLS]   folded edge indices (VMEM)
    sel_ref   : f32   [NCOLS, K]    lane-expansion (selection) matrix
    tgt_ref   : f32   [1, K]        per-lane compare target (k mod 6)
    table_ref : f32   [K, G*H]      fused / stacked embedding table
    out_ref   : f32   [TR, G*H]     folded output rows
    """
    # Expand the NCOLS indices to K lanes on the MXU (free slot), so the
    # one-hot build is a single compare + cast instead of a 12-pass VALU loop.
    idx_f = idx_ref[...].astype(jnp.float32)                       # [TR, NCOLS]
    expanded = jnp.dot(idx_f, sel_ref[...],
                       preferred_element_type=jnp.float32)         # [TR, K]
    onehot = (expanded == tgt_ref[...]).astype(jnp.float32)        # [TR, K]

    # Single fused gather+sum as one MXU matmul.
    out_ref[...] = jnp.dot(onehot, table_ref[...],
                           preferred_element_type=jnp.float32
                           ).astype(out_ref.dtype)


@functools.partial(jax.jit, static_argnames=("block_rows", "out_dtype"))
def bond_encoder(edge_attr, tables, *, block_rows=2048, out_dtype=jnp.float32):
    """edge_attr: int [E] or [E, nf] (nf <= 3); tables: f32 [3, 6, H]."""
    if edge_attr.ndim == 1:
        edge_attr = edge_attr[:, None]
    e, nf = edge_attr.shape
    nf_tab, vocab, h = tables.shape
    assert nf <= nf_tab and vocab == NUM_EMB_ROWS

    # Lane-fold factor: pack g edges per stored row so the row width g*h is a
    # multiple of 128 (unmasked vst).  lcm-based so H = 48, 96, ... also fold;
    # fall back to g=1 if that would blow up the fused table width.
    if h < LANES:
        g = LANES // math.gcd(h, LANES)          # = lcm(h, 128) // h
        if g * h > 4 * LANES:
            g = 1  # TODO(synk): awkward H (<128, large lcm) keeps masked stores
    else:
        g = 1
    ncols = g * nf
    k = ncols * NUM_EMB_ROWS
    hw = g * h

    # Pad E only to a multiple of g (tiny tail pad, skipped when unnecessary);
    # the ragged last row-block is handled by the grid itself.
    idx = edge_attr.astype(jnp.int32)
    e_pad = _round_up(e, g)
    if e_pad > e:
        idx = jnp.pad(idx, ((0, e_pad - e), (0, 0)))
    rows = e_pad // g
    idx_folded = idx.reshape(rows, ncols)

    # Row tile: large for big E (per-step overhead ~0.35us, VMEM ~2 MiB at
    # br=2048), but keep >= 2 grid steps when there is enough work so both
    # v7x TensorCores are used, and never larger than the work itself.
    br = max(8, min(block_rows, _round_up(pl.cdiv(rows, 2), 8)))
    grid = (pl.cdiv(rows, br),)

    # Tiny constants / fused table, each built with one kron/tile:
    #   sel[j, j*6+v] = 1                                (lane expansion)
    #   tgt[0, j*6+v] = v                                (compare target)
    #   big[(gi*nf+f)*6+v, gi*h:(gi+1)*h] = tables[f][v] (stacked table)
    tab = tables[:nf].astype(jnp.float32).reshape(nf * NUM_EMB_ROWS, h)
    big = jnp.kron(jnp.eye(g, dtype=jnp.float32), tab)                 # [K, HW]
    sel = jnp.kron(jnp.eye(ncols, dtype=jnp.float32),
                   jnp.ones((1, NUM_EMB_ROWS), jnp.float32))           # [NCOLS, K]
    tgt = jnp.tile(jnp.arange(NUM_EMB_ROWS, dtype=jnp.float32),
                   ncols)[None, :]                                     # [1, K]

    out = pl.pallas_call(
        _bond_encoder_kernel,
        out_shape=jax.ShapeDtypeStruct((rows, hw), out_dtype),
        grid_spec=pltpu.PrefetchScalarGridSpec(
            num_scalar_prefetch=0,
            grid=grid,
            in_specs=[
                # folded indices: tile over rows, full (small) column axis
                pl.BlockSpec((br, ncols), lambda i: (i, 0)),
                # tiny constants: VMEM resident every step
                pl.BlockSpec((ncols, k), lambda i: (0, 0)),
                pl.BlockSpec((1, k), lambda i: (0, 0)),
                pl.BlockSpec((k, hw), lambda i: (0, 0)),
            ],
            out_specs=pl.BlockSpec((br, hw), lambda i: (i, 0)),
        ),
        compiler_params=pltpu.CompilerParams(
            dimension_semantics=("parallel",)),
    )(idx_folded, sel, tgt, big)

    # Unfold back to [E, H] and drop the (at most g-1) padded rows.
    return out.reshape(e_pad, h)[:e]


def bond_encoder_ref(edge_attr, tables):
    """Pure-JAX reference matching the PyTorch forward."""
    if edge_attr.ndim == 1:
        edge_attr = edge_attr[:, None]
    out = 0
    for i in range(edge_attr.shape[1]):
        out = out + tables[i][edge_attr[:, i]]
    return out


if __name__ == "__main__":
    key = jax.random.PRNGKey(0)
    k_tab, k_idx = jax.random.split(key)

    hidden_channels = 32
    num_edges = 19  # small, deliberately not a multiple of tile/fold sizes

    # PyTorch nn.Embedding default init is N(0, 1).
    tables = jax.random.normal(
        k_tab, (NUM_FEATS, NUM_EMB_ROWS, hidden_channels), dtype=jnp.float32)

    edge_attr = jax.random.randint(
        k_idx, (num_edges, NUM_FEATS), 0, NUM_EMB_ROWS, dtype=jnp.int32)

    out = jax.block_until_ready(bond_encoder(edge_attr, tables))
    ref = bond_encoder_ref(edge_attr, tables)
    assert out.shape == (num_edges, hidden_channels)
    assert jnp.allclose(out, ref, atol=1e-5, rtol=1e-5), "mismatch vs reference"

    # Also exercise the 1-D edge_attr path of the module.
    out1d = jax.block_until_ready(bond_encoder(edge_attr[:, 0], tables))
    ref1d = bond_encoder_ref(edge_attr[:, 0], tables)
    assert jnp.allclose(out1d, ref1d, atol=1e-5, rtol=1e-5), "1-D path mismatch"

    print("KERNEL_OK")
</pallas_src>

<mosaic_0001>
module attributes {stable_mosaic.version = 11 : i64} {
  func.func @_bond_encoder_kernel(%arg0: i32, %arg1: memref<8x12xi32, #tpu.memory_space<vmem>>, %arg2: memref<12x72xf32, #tpu.memory_space<vmem>>, %arg3: memref<1x72xf32, #tpu.memory_space<vmem>>, %arg4: memref<72x128xf32, #tpu.memory_space<vmem>>, %arg5: memref<8x128xf32, #tpu.memory_space<vmem>>) attributes {dimension_semantics = [#tpu.dimension_semantics<parallel>], iteration_bounds = array<i64: 1>, scalar_prefetch = 0 : i64, scratch_operands = 0 : i64, tpu.core_type = #tpu.core_type<tc>, window_params = [{transform_indices = @transform_0, window_bounds = array<i64: 8, 12>}, {pipeline_mode = #tpu.pipeline_mode<synchronous>, transform_indices = @transform_1, window_bounds = array<i64: 12, 72>}, {pipeline_mode = #tpu.pipeline_mode<synchronous>, transform_indices = @transform_2, window_bounds = array<i64: 1, 72>}, {pipeline_mode = #tpu.pipeline_mode<synchronous>, transform_indices = @transform_3, window_bounds = array<i64: 72, 128>}, {transform_indices = @transform_4, window_bounds = array<i64: 8, 128>}]} {
    %c0 = arith.constant 0 : index
    %c0_0 = arith.constant 0 : index
    %0 = vector.load %arg1[%c0, %c0_0] : memref<8x12xi32, #tpu.memory_space<vmem>>, vector<8x12xi32>
    %1 = arith.sitofp %0 : vector<8x12xi32> to vector<8x12xf32>
    %c0_1 = arith.constant 0 : index
    %c0_2 = arith.constant 0 : index
    %2 = vector.load %arg2[%c0_1, %c0_2] : memref<12x72xf32, #tpu.memory_space<vmem>>, vector<12x72xf32>
    %cst = arith.constant dense<0.000000e+00> : vector<8x72xf32>
    %3 = tpu.matmul %1, %2, %cst {dimension_numbers = #tpu.dot_dimension_numbers<[1], [0], [0], [1], [0, 0, 1, 1], [], []>} : vector<8x12xf32>, vector<12x72xf32>, vector<8x72xf32> -> vector<8x72xf32>
    %c0_3 = arith.constant 0 : index
    %c0_4 = arith.constant 0 : index
    %4 = vector.load %arg3[%c0_3, %c0_4] : memref<1x72xf32, #tpu.memory_space<vmem>>, vector<1x72xf32>
    %5 = vector.broadcast %4 : vector<1x72xf32> to vector<8x72xf32>
    %6 = arith.cmpf oeq, %3, %5 : vector<8x72xf32>
    %7 = arith.extui %6 : vector<8x72xi1> to vector<8x72xi32>
    %8 = arith.sitofp %7 : vector<8x72xi32> to vector<8x72xf32>
    %c0_5 = arith.constant 0 : index
    %c0_6 = arith.constant 0 : index
    %9 = vector.load %arg4[%c0_5, %c0_6] : memref<72x128xf32, #tpu.memory_space<vmem>>, vector<72x128xf32>
    %cst_7 = arith.constant dense<0.000000e+00> : vector<8x128xf32>
    %10 = tpu.matmul %8, %9, %cst_7 {dimension_numbers = #tpu.dot_dimension_numbers<[1], [0], [0], [1], [0, 0, 1, 1], [], []>} : vector<8x72xf32>, vector<72x128xf32>, vector<8x128xf32> -> vector<8x128xf32>
    %c0_8 = arith.constant 0 : index
    %c0_9 = arith.constant 0 : index
    %11 = vector.load %arg5[%c0_8, %c0_9] : memref<8x128xf32, #tpu.memory_space<vmem>>, vector<8x128xf32>
    tpu.vector_store %arg5[%c0_8, %c0_9], %10 {strides = array<i32>} : memref<8x128xf32, #tpu.memory_space<vmem>>, vector<8x128xf32>,
    return
  }
  func.func @transform_0(%arg0: i32) -> (i32, i32) {
    %c0_i32 = arith.constant 0 : i32
    %c0_i32_0 = arith.constant 0 : i32
    return %arg0, %c0_i32 : i32, i32
  }
  func.func @transform_1(%arg0: i32) -> (i32, i32) {
    %c0_i32 = arith.constant 0 : i32
    %c0_i32_0 = arith.constant 0 : i32
    %c0_i32_1 = arith.constant 0 : i32
    return %c0_i32, %c0_i32_0 : i32, i32
  }
  func.func @transform_2(%arg0: i32) -> (i32, i32) {
    %c0_i32 = arith.constant 0 : i32
    %c0_i32_0 = arith.constant 0 : i32
    %c0_i32_1 = arith.constant 0 : i32
    return %c0_i32, %c0_i32_0 : i32, i32
  }
  func.func @transform_3(%arg0: i32) -> (i32, i32) {
    %c0_i32 = arith.constant 0 : i32
    %c0_i32_0 = arith.constant 0 : i32
    %c0_i32_1 = arith.constant 0 : i32
    return %c0_i32, %c0_i32_0 : i32, i32
  }
  func.func @transform_4(%arg0: i32) -> (i32, i32) {
    %c0_i32 = arith.constant 0 : i32
    %c0_i32_0 = arith.constant 0 : i32
    return %arg0, %c0_i32 : i32, i32
  }
}

</mosaic_0001>

<llo_original>
// kernel: mul.18
$region0: #{mul.18}
  %s0 = inlined_call_operand.hbm [shape: f32[3,6,32], index: 0, kind: input, shape index: {}]
  %s1 = inlined_call_operand.vmem [shape: f32[18,32], index: 1, kind: output, shape index: {}]
  $region1: #{mul.18} parent=0
    #allocation0 [shape = 'u8[12288]{0}', space=vmem, size = 0x3000, scoped, tag = 'operand span for operand 0']
    #allocation1 [shape = 's32[1]{0}', space=sflag, size = 0x4, scoped, tag = 'scoped memory for mul.18']
    %2 = vsyncpa [#allocation1], 0
    %s4 = ssub.s32 384, 384
    %5 = vsyncadd [#allocation1], %s4
    %s7 = sshll.u32 [#allocation0], 4
    %s8 = int_to_ptr.vmem [resolvable:$true] %s7
    %10 = dma.hbm_to_vmem [thread:$0]  %s0, 384, %s8, [#allocation1]
    %11 = dma.done [#allocation1], 384
    %v12 = vld [vmem:[#allocation0] sm:$0x3f]
    %vm13 = vcmask 261120
    %14 = vst.msk [vmem:[%s1] sm:$0x3f] %vm13, %v12
    %s15 = scalar_lea.vmem [#allocation0], 8
    %v16 = vld [vmem:[%s15] sm:$0x3f]
    %vm17 = vcmask 261120
    %s18 = scalar_lea.vmem %s1, 6
    %19 = vst.msk [vmem:[%s18] sm:$0x3f] %vm17, %v16
    %s20 = scalar_lea.vmem [#allocation0], 16
    %v21 = vld [vmem:[%s20] sm:$0x3f]
    %vm22 = vcmask 261120
    %s23 = scalar_lea.vmem %s1, 12
    %24 = vst.msk [vmem:[%s23] sm:$0x3f] %vm22, %v21
    %25 = vsyncpa [#allocation1], 1

// kernel: tile.9
$region0: #{tile.9}
  %s0 = inlined_call_operand.vmem [shape: f32[12,6], index: 0, kind: input, shape index: {}]
  %s1 = inlined_call_operand.vmem [shape: f32[1,72], index: 1, kind: output, shape index: {}]
  $region1: #{tile.9} parent=0
    #allocation0 [shape = 'u8[4096]{0}', space=vmem, size = 0x1000, scoped, tag = 'scoped mem for output reshape']
    %v2 = vld [vmem:[%s0] sm:$0x1]
    %vm3 = vcmask 48128
    %4 = vst.msk [vmem:[#allocation0] sm:$0x1] %vm3, %v2
    %s5 = scalar_lea.vmem %s0, 11
    %v6 = vld [vmem:[%s5] sm:$0x1]
    %7 = vrot.lane.b32.xlu0 %v6, 66
    %v8 = vpop.permute.xlu0 %7
    %vm9 = vcmask 589328
    %10 = vst.msk [vmem:[#allocation0] sm:$0x1] %vm9, %v8
    %s11 = scalar_lea.vmem %s0, 10
    %v12 = vld [vmem:[%s11] sm:$0x1]
    %13 = vrot.lane.b32.xlu0 %v12, 60
    %v14 = vpop.permute.xlu0 %13
    %vm15 = vcmask 540128
    %16 = vst.msk [vmem:[#allocation0] sm:$0x1] %vm15, %v14
    %s17 = scalar_lea.vmem %s0, 9
    %v18 = vld [vmem:[%s17] sm:$0x1]
    %19 = vrot.lane.b32.xlu0 %v18, 54
    %v20 = vpop.permute.xlu0 %19
    %vm21 = vcmask 490928
    %22 = vst.msk [vmem:[#allocation0] sm:$0x1] %vm21, %v20
    %s23 = scalar_lea.vmem %s0, 8
    %v24 = vld [vmem:[%s23] sm:$0x1]
    %25 = vrot.lane.b32.xlu0 %v24, 48
    %v26 = vpop.permute.xlu0 %25
    %vm27 = vcmask 441728
    %28 = vst.msk [vmem:[#allocation0] sm:$0x1] %vm27, %v26
    %s29 = scalar_lea.vmem %s0, 7
    %v30 = vld [vmem:[%s29] sm:$0x1]
    %31 = vrot.lane.b32.xlu0 %v30, 42
    %v32 = vpop.permute.xlu0 %31
    %vm33 = vcmask 392528
    %34 = vst.msk [vmem:[#allocation0] sm:$0x1] %vm33, %v32
    %s35 = scalar_lea.vmem %s0, 6
    %v36 = vld [vmem:[%s35] sm:$0x1]
    %37 = vrot.lane.b32.xlu0 %v36, 36
    %v38 = vpop.permute.xlu0 %37
    %vm39 = vcmask 343328
    %40 = vst.msk [vmem:[#allocation0] sm:$0x1] %vm39, %v38
    %s41 = scalar_lea.vmem %s0, 5
    %v42 = vld [vmem:[%s41] sm:$0x1]
    %43 = vrot.lane.b32.xlu0 %v42, 30
    %v44 = vpop.permute.xlu0 %43
    %vm45 = vcmask 294128
    %46 = vst.msk [vmem:[#allocation0] sm:$0x1] %vm45, %v44
    %s47 = scalar_lea.vmem %s0, 4
    %v48 = vld [vmem:[%s47] sm:$0x1]
    %49 = vrot.lane.b32.xlu0 %v48, 24
    %v50 = vpop.permute.xlu0 %49
    %vm51 = vcmask 244928
    %52 = vst.msk [vmem:[#allocation0] sm:$0x1] %vm51, %v50
    %s53 = scalar_lea.vmem %s0, 3
    %v54 = vld [vmem:[%s53] sm:$0x1]
    %55 = vrot.lane.b32.xlu0 %v54, 18
    %v56 = vpop.permute.xlu0 %55
    %vm57 = vcmask 195728
    %58 = vst.msk [vmem:[#allocation0] sm:$0x1] %vm57, %v56
    %s59 = scalar_lea.vmem %s0, 2
    %v60 = vld [vmem:[%s59] sm:$0x1]
    %61 = vrot.lane.b32.xlu0 %v60, 12
    %v62 = vpop.permute.xlu0 %61
    %vm63 = vcmask 146528
    %64 = vst.msk [vmem:[#allocation0] sm:$0x1] %vm63, %v62
    %s65 = scalar_lea.vmem %s0, 1
    %v66 = vld [vmem:[%s65] sm:$0x1]
    %67 = vrot.lane.b32.xlu0 %v66, 6
    %v68 = vpop.permute.xlu0 %67
    %vm69 = vcmask 97328
    %70 = vst.msk [vmem:[#allocation0] sm:$0x1] %vm69, %v68
    %s72 = sshll.u32 1, 1
    %s73 = ssub.s32 %s72, 1
    %v75 = vld [vmem:[#allocation0] sm:%s73]
    %s76 = sshll.u32 1, 1
    %s77 = ssub.s32 %s76, 1
    %78 = vst [vmem:[%s1] sm:%s77] %v75

// kernel: bond_encoder.1
$region0: #{bond_encoder.1}
  #allocation0 [shape = 'u32[]', space=smem, size = 0x4, offset = 0x4, fixed_abs, tag = 'smem constant byte address 0x4 - core index']
  #allocation1 [shape = 'u32[144,128]{1,0:T(1,128)}', space=vmem, size = 0x12000, scoped, tag = 'internal scratch']
  %s0 = inlined_call_operand.vmem [shape: s32[5,12], index: 0, kind: input, shape index: {}]
  %s1 = inlined_call_operand.vmem [shape: f32[12,72], index: 1, kind: input, shape index: {}]
  %s2 = inlined_call_operand.vmem [shape: f32[1,72], index: 2, kind: input, shape index: {}]
  %s3 = inlined_call_operand.vmem [shape: f32[72,128], index: 3, kind: input, shape index: {}]
  %s4 = inlined_call_operand.vmem [shape: f32[5,128], index: 4, kind: output, shape index: {}]
  %s5 = sld [smem:[#allocation0]]
  $region26: #{bond_encoder.1} parent=0
    _
  %s7 = ssub.s32 1, %s5
  %s8 = scalar_select 0, %s7, %s5
  // Predicated region
  $region2: #{bond_encoder.1} parent=0 // pred_check
    _
  $region3: #{bond_encoder.1} parent=0 // pred_check_branch
    %10 = sbr.rel (0) target = $region5
  $region4: #{bond_encoder.1} parent=0 // pred_region
    _
  $region5: #{bond_encoder.1} parent=0 // pred_fallthru
    _
  // Predicated region
  $region6: #{bond_encoder.1} parent=0 // pred_check
    _
  $region7: #{bond_encoder.1} parent=0 // pred_check_branch
    %12 = sbr.rel (0) target = $region9
  $region8: #{bond_encoder.1} parent=0 // pred_region
    _
  $region9: #{bond_encoder.1} parent=0 // pred_fallthru
    _
  // Predicated region
  $region10: #{bond_encoder.1} parent=0 // pred_check
    _
  $region11: #{bond_encoder.1} parent=0 // pred_check_branch
    %14 = sbr.rel (0) target = $region13
  $region12: #{bond_encoder.1} parent=0 // pred_region
    _
  $region13: #{bond_encoder.1} parent=0 // pred_fallthru
    _
  // Predicated region
  $region14: #{bond_encoder.1} parent=0 // pred_check
    _
  $region15: #{bond_encoder.1} parent=0 // pred_check_branch
    %16 = sbr.rel (0) target = $region17
  $region16: #{bond_encoder.1} parent=0 // pred_region
    _
  $region17: #{bond_encoder.1} parent=0 // pred_fallthru
    _
  %v17 = vld [vmem:[%s0] sm:$0xff]
  %v18 = vcvt.s32.f32 %v17
  %v19 = vld [vmem:[%s1] sm:$0xff]
  %v20 = vld [vmem:[%s1 + $0x8] sm:$0xf]
  %vm21 = vcmask 97280
  %v23 = vsel %vm21, %v18, 0
  %vm25 = vcmask 1043456
  %v27 = vsel %vm25, %v20, 0
  %29 = vmatprep.subr.mxu0 0.0
  %30 = vmatpush1.msra.mxu0 0.0
  %31 = vmatprep.subr.mxu0 0.0
  %32 = vmatpush1.msra.mxu0 0.0
  %33 = vmatprep.subr.mxu0 0.0
  %34 = vmatpush1.msra.mxu0 0.0
  %35 = vmatprep.subr.mxu0 0.0
  %36 = vmatpush1.msra.mxu0 0.0
  %37 = vmatprep.subr.mxu0 0.0
  %38 = vmatpush1.msra.mxu0 0.0
  %39 = vmatprep.subr.mxu0 0.0
  %40 = vmatpush1.msra.mxu0 0.0
  %41 = vmatprep.subr.mxu0 0.0
  %42 = vmatpush1.msra.mxu0 0.0
  %43 = vmatprep.subr.mxu0 0.0
  %44 = vmatpush1.msra.mxu0 0.0
  %45 = vmatprep.subr.mxu0 0.0
  %46 = vmatpush1.msra.mxu0 0.0
  %47 = vmatprep.subr.mxu0 0.0
  %48 = vmatpush1.msra.mxu0 0.0
  %49 = vmatprep.subr.mxu0 0.0
  %50 = vmatpush1.msra.mxu0 0.0
  %51 = vmatprep.subr.mxu0 0.0
  %52 = vmatpush1.msra.mxu0 0.0
  %53 = vmatprep.subr.mxu0 0.0
  %54 = vmatpush1.msra.mxu0 0.0
  %55 = vmatprep.subr.mxu0 0.0
  %56 = vmatpush1.msra.mxu0 0.0
  %57 = vmatprep.subr.mxu0 0.0
  %58 = vmatpush1.msra.mxu0 %v27
  %59 = vmatprep.subr.mxu0 0.0
  %60 = vmatpush1.msra.mxu0 %v19
  %61 = vmatprep.subr.mxu0 0.0
  %62 = vmatpush2.msra.mxu0 0.0
  %63 = vmatprep.subr.mxu0 0.0
  %64 = vmatpush2.msra.mxu0 0.0
  %65 = vmatprep.subr.mxu0 0.0
  %66 = vmatpush2.msra.mxu0 0.0
  %67 = vmatprep.subr.mxu0 0.0
  %68 = vmatpush2.msra.mxu0 0.0
  %69 = vmatprep.subr.mxu0 0.0
  %70 = vmatpush2.msra.mxu0 0.0
  %71 = vmatprep.subr.mxu0 0.0
  %72 = vmatpush2.msra.mxu0 0.0
  %73 = vmatprep.subr.mxu0 0.0
  %74 = vmatpush2.msra.mxu0 0.0
  %75 = vmatprep.subr.mxu0 0.0
  %76 = vmatpush2.msra.mxu0 0.0
  %77 = vmatprep.subr.mxu0 0.0
  %78 = vmatpush2.msra.mxu0 0.0
  %79 = vmatprep.subr.mxu0 0.0
  %80 = vmatpush2.msra.mxu0 0.0
  %81 = vmatprep.subr.mxu0 0.0
  %82 = vmatpush2.msra.mxu0 0.0
  %83 = vmatprep.subr.mxu0 0.0
  %84 = vmatpush2.msra.mxu0 0.0
  %85 = vmatprep.subr.mxu0 0.0
  %86 = vmatpush2.msra.mxu0 0.0
  %87 = vmatprep.subr.mxu0 0.0
  %88 = vmatpush2.msra.mxu0 0.0
  %89 = vmatprep.subr.mxu0 0.0
  %90 = vmatpush2.msra.mxu0 0.0
  %91 = vmatprep.subr.mxu0 0.0
  %92 = vmatpush2.msra.mxu0 0.0
  %93 = vmatprep.mubr.f32.mxu0 0.0
  %94 = vmatmul.mubr.f32.gmra.mxu0 %v23
  %v95 = vpop.f32.mrf.mxu0
  %v96 = vadd.f32 0.0, %v95
  %v97 = vpop.f32.mrf.mxu0
  %98 = vdwg.mxu0
  %v99 = vld [vmem:[%s2] sm:$0x1]
  %v101 = vlaneseq
  %v102 = vshrl.u32 %v101, 7
  %v103 = vsub.s32 0, %v102
  %v104 = vrot.slane %v99, %v103
  %vm106 = vcmp.eq.f32.partialorder %v96, %v104
  %v107 = vsel %vm106, 1, 0
  %v108 = vcvt.s32.f32 %v107
  %v109 = vld [vmem:[%s3] sm:$0xff]
  %v110 = vld [vmem:[%s3 + $0x8] sm:$0xff]
  %v111 = vld [vmem:[%s3 + $0x10] sm:$0xff]
  %v112 = vld [vmem:[%s3 + $0x18] sm:$0xff]
  %v113 = vld [vmem:[%s3 + $0x20] sm:$0xff]
  %v114 = vld [vmem:[%s3 + $0x28] sm:$0xff]
  %v115 = vld [vmem:[%s3 + $0x30] sm:$0xff]
  %v116 = vld [vmem:[%s3 + $0x38] sm:$0xff]
  %v117 = vld [vmem:[%s3 + $0x40] sm:$0xff]
  %vm118 = vcmask 588800
  %v120 = vsel %vm118, %v108, 0
  %122 = vmatprep.subr.mxu0 0.0
  %123 = vmatpush1.msra.mxu0 0.0
  %124 = vmatprep.subr.mxu0 0.0
  %125 = vmatpush1.msra.mxu0 0.0
  %126 = vmatprep.subr.mxu0 0.0
  %127 = vmatpush1.msra.mxu0 0.0
  %128 = vmatprep.subr.mxu0 0.0
  %129 = vmatpush1.msra.mxu0 0.0
  %130 = vmatprep.subr.mxu0 0.0
  %131 = vmatpush1.msra.mxu0 0.0
  %132 = vmatprep.subr.mxu0 0.0
  %133 = vmatpush1.msra.mxu0 0.0
  %134 = vmatprep.subr.mxu0 0.0
  %135 = vmatpush1.msra.mxu0 0.0
  %136 = vmatprep.subr.mxu0 0.0
  %137 = vmatpush1.msra.mxu0 %v117
  %138 = vmatprep.subr.mxu0 0.0
  %139 = vmatpush1.msra.mxu0 %v116
  %140 = vmatprep.subr.mxu0 0.0
  %141 = vmatpush1.msra.mxu0 %v115
  %142 = vmatprep.subr.mxu0 0.0
  %143 = vmatpush1.msra.mxu0 %v114
  %144 = vmatprep.subr.mxu0 0.0
  %145 = vmatpush1.msra.mxu0 %v113
  %146 = vmatprep.subr.mxu0 0.0
  %147 = vmatpush1.msra.mxu0 %v112
  %148 = vmatprep.subr.mxu0 0.0
  %149 = vmatpush1.msra.mxu0 %v111
  %150 = vmatprep.subr.mxu0 0.0
  %151 = vmatpush1.msra.mxu0 %v110
  %152 = vmatprep.subr.mxu0 0.0
  %153 = vmatpush1.msra.mxu0 %v109
  %154 = vmatprep.subr.mxu0 0.0
  %155 = vmatpush2.msra.mxu0 0.0
  %156 = vmatprep.subr.mxu0 0.0
  %157 = vmatpush2.msra.mxu0 0.0
  %158 = vmatprep.subr.mxu0 0.0
  %159 = vmatpush2.msra.mxu0 0.0
  %160 = vmatprep.subr.mxu0 0.0
  %161 = vmatpush2.msra.mxu0 0.0
  %162 = vmatprep.subr.mxu0 0.0
  %163 = vmatpush2.msra.mxu0 0.0
  %164 = vmatprep.subr.mxu0 0.0
  %165 = vmatpush2.msra.mxu0 0.0
  %166 = vmatprep.subr.mxu0 0.0
  %167 = vmatpush2.msra.mxu0 0.0
  %168 = vmatprep.subr.mxu0 0.0
  %169 = vmatpush2.msra.mxu0 0.0
  %170 = vmatprep.subr.mxu0 0.0
  %171 = vmatpush2.msra.mxu0 0.0
  %172 = vmatprep.subr.mxu0 0.0
  %173 = vmatpush2.msra.mxu0 0.0
  %174 = vmatprep.subr.mxu0 0.0
  %175 = vmatpush2.msra.mxu0 0.0
  %176 = vmatprep.subr.mxu0 0.0
  %177 = vmatpush2.msra.mxu0 0.0
  %178 = vmatprep.subr.mxu0 0.0
  %179 = vmatpush2.msra.mxu0 0.0
  %180 = vmatprep.subr.mxu0 0.0
  %181 = vmatpush2.msra.mxu0 0.0
  %182 = vmatprep.subr.mxu0 0.0
  %183 = vmatpush2.msra.mxu0 0.0
  %184 = vmatprep.subr.mxu0 0.0
  %185 = vmatpush2.msra.mxu0 0.0
  %186 = vmatprep.mubr.f32.mxu0 0.0
  %187 = vmatmul.mubr.f32.gmra.mxu0 %v120
  %v188 = vpop.f32.mrf.mxu0
  %v189 = vadd.f32 0.0, %v188
  %v190 = vpop.f32.mrf.mxu0
  %191 = vdwg.mxu0
  %192 = vst [vmem:[%s4] sm:$0xff] %v189
  // Predicated region
  $region18: #{bond_encoder.1} parent=0 // pred_check
    _
  $region19: #{bond_encoder.1} parent=0 // pred_check_branch
    %194 = sbr.rel (0) target = $region21
  $region20: #{bond_encoder.1} parent=0 // pred_region
    _
  $region21: #{bond_encoder.1} parent=0 // pred_fallthru
    _
  // Predicated region
  $region22: #{bond_encoder.1} parent=0 // pred_check
    _
  $region23: #{bond_encoder.1} parent=0 // pred_check_branch
    %196 = sbr.rel (0) target = $region25
  $region24: #{bond_encoder.1} parent=0 // pred_region
    _
  $region25: #{bond_encoder.1} parent=0 // pred_fallthru
    _

</llo_original>
